<compile_context>
chip_gen: v5e
topology: v5e:2x2
jax: 0.10.0
libtpu: 0.0.40
codegen_flags: <defaults>
</compile_context>

<pallas_src>
import math
from functools import partial

import jax
import jax.numpy as jnp
from jax import lax
from jax.experimental import pallas as pl
from jax.experimental.pallas import tpu as pltpu

_LANE = 128
_SUBLANE = 8
_NSPLIT = 2                              # leading parallel axis (one per TC on v7x)
_MAX_BLOCK_ROWS = 8192                   # 8192*128*4 B = 4 MiB per f32 buffer
_FUSED_ELEMS_LIMIT = 2 * 1024 * 1024     # <= 8 MiB f32 -> single fused pass
_VMEM_LIMIT = 48 * 1024 * 1024           # explicit scoped-VMEM cap (< v7x 64 MiB)


def _round_up(x, m):
    return ((x + m - 1) // m) * m


# ----------------------------- Pallas kernels ------------------------------

def _fused_kernel(x_ref, o_ref):
    """Whole tensor resident in VMEM: min/max + normalize in one pass."""
    x = x_ref[...].astype(jnp.float32)
    mn = jnp.min(x)
    mx = jnp.max(x)
    inv = 1.0 / (mx - mn + 1e-6)          # one scalar reciprocal, not per-element
    o_ref[...] = (x - mn) * inv


def _make_minmax_kernel(total_rows, block_rows, tiles_per_core, ntiles):
    """Global min/max with a single-vreg (8,128) VMEM accumulator per core."""
    groups = block_rows // _SUBLANE       # block_rows is always a multiple of 8

    def kernel(x_ref, min_ref, max_ref, vmin, vmax):
        c = pl.program_id(0)              # core split (parallel)
        i = pl.program_id(1)              # reduction step (arbitrary/sequential)
        t = c * tiles_per_core + i        # logical global tile index

        @pl.when(i == 0)
        def _():
            vmin[...] = jnp.full(vmin.shape, jnp.inf, vmin.dtype)
            vmax[...] = jnp.full(vmax.shape, -jnp.inf, vmax.dtype)

        x = x_ref[...].astype(jnp.float32)

        # Fast path: full, in-bounds tiles -> stacked elementwise min/max
        # down to one (8,128) vreg, then fold into the accumulator.
        @pl.when(t < ntiles - 1)
        def _():
            xr = x.reshape(groups, _SUBLANE, _LANE)
            vmin[...] = jnp.minimum(vmin[...], jnp.min(xr, axis=0))
            vmax[...] = jnp.maximum(vmax[...], jnp.max(xr, axis=0))

        # Slow path: only the last real tile (possibly ragged) and the phantom
        # tile of the 2-way split; mask invalid rows with +/-inf (neutral).
        @pl.when(t >= ntiles - 1)
        def _():
            row = t * block_rows + lax.broadcasted_iota(jnp.int32, x.shape, 0)
            valid = row < total_rows
            x_lo = jnp.where(valid, x, jnp.inf).reshape(groups, _SUBLANE, _LANE)
            x_hi = jnp.where(valid, x, -jnp.inf).reshape(groups, _SUBLANE, _LANE)
            vmin[...] = jnp.minimum(vmin[...], jnp.min(x_lo, axis=0))
            vmax[...] = jnp.maximum(vmax[...], jnp.max(x_hi, axis=0))

        # Cross-sublane/lane reduce once per core, on its last step.
        @pl.when(i == pl.num_programs(1) - 1)
        def _():
            min_ref[0, 0] = jnp.min(vmin[...])
            max_ref[0, 0] = jnp.max(vmax[...])

    return kernel


def _normalize_kernel(p_ref, x_ref, o_ref):
    """(x - mn) * inv, with mn/inv scalars read from SMEM."""
    mn = p_ref[0]
    inv = p_ref[1]
    o_ref[...] = (x_ref[...].astype(jnp.float32) - mn) * inv


# ----------------------------- Pallas wrappers ------------------------------

def _fused_normalize(x2d):
    return pl.pallas_call(
        _fused_kernel,
        out_shape=jax.ShapeDtypeStruct(x2d.shape, jnp.float32),
        grid=(1,),
        in_specs=[pl.BlockSpec(x2d.shape, lambda i: (0, 0))],
        out_specs=pl.BlockSpec(x2d.shape, lambda i: (0, 0)),
        compiler_params=pltpu.CompilerParams(vmem_limit_bytes=_VMEM_LIMIT),
    )(x2d)


def _global_minmax(x2d, block_rows):
    rows = x2d.shape[0]
    ntiles = pl.cdiv(rows, block_rows)
    tiles_per_core = pl.cdiv(ntiles, _NSPLIT)

    # Clamp the block index so the (at most one) phantom tile of the 2-way
    # split re-reads a valid block; its rows are masked out in the kernel.
    def in_map(c, i):
        return (jnp.minimum(c * tiles_per_core + i, ntiles - 1), 0)

    mins, maxs = pl.pallas_call(
        _make_minmax_kernel(rows, block_rows, tiles_per_core, ntiles),
        out_shape=(jax.ShapeDtypeStruct((_NSPLIT, 1), jnp.float32),
                   jax.ShapeDtypeStruct((_NSPLIT, 1), jnp.float32)),
        grid=(_NSPLIT, tiles_per_core),
        in_specs=[pl.BlockSpec((block_rows, _LANE), in_map)],
        out_specs=(pl.BlockSpec((1, 1), lambda c, i: (c, 0)),
                   pl.BlockSpec((1, 1), lambda c, i: (c, 0))),
        scratch_shapes=[pltpu.VMEM((_SUBLANE, _LANE), jnp.float32),
                        pltpu.VMEM((_SUBLANE, _LANE), jnp.float32)],
        # Inner reduction axis MUST stay "arbitrary": the running min/max
        # scratch is carried sequentially across its steps.
        compiler_params=pltpu.CompilerParams(
            dimension_semantics=("parallel", "arbitrary"),
            vmem_limit_bytes=_VMEM_LIMIT),
    )(x2d)
    return mins, maxs


def _normalize(x2d, params, block_rows):
    rows = x2d.shape[0]
    ntiles = pl.cdiv(rows, block_rows)
    return pl.pallas_call(
        _normalize_kernel,
        out_shape=jax.ShapeDtypeStruct(x2d.shape, jnp.float32),
        grid=(ntiles,),
        in_specs=[pl.BlockSpec(memory_space=pltpu.MemorySpace.SMEM),
                  pl.BlockSpec((block_rows, _LANE), lambda i: (i, 0))],
        out_specs=pl.BlockSpec((block_rows, _LANE), lambda i: (i, 0)),
        compiler_params=pltpu.CompilerParams(
            dimension_semantics=("parallel",),
            vmem_limit_bytes=_VMEM_LIMIT),
    )(params, x2d)


@partial(jax.jit, static_argnames=("fused_elems_limit",))
def normalize_image(image, *, fused_elems_limit=_FUSED_ELEMS_LIMIT):
    """Pallas-backed: (image - image.min()) / (image.max() - image.min() + 1e-6)."""
    n = image.size
    flat = image.reshape(-1)                       # free (contiguous view)
    if n % _LANE != 0:
        # Rare: pad with a replicated existing value so min/max are unchanged.
        flat = jnp.pad(flat, (0, _LANE - n % _LANE), mode="edge")
    x2d = flat.reshape(-1, _LANE)
    rows = x2d.shape[0]

    if n <= fused_elems_limit:
        # Whole tensor resident in VMEM: one fused pass (2x HBM traffic total).
        y2d = _fused_normalize(x2d)
    else:
        # Two passes with large lane-dense blocks.
        block_rows = min(_MAX_BLOCK_ROWS, _round_up(rows, _SUBLANE))
        mins, maxs = _global_minmax(x2d, block_rows)
        mn = jnp.min(mins)                          # combine per-core partials
        mx = jnp.max(maxs)
        inv = 1.0 / (mx - mn + 1e-6)
        params = jnp.stack([mn, inv]).astype(jnp.float32)
        y2d = _normalize(x2d, params, block_rows)

    return y2d.reshape(-1)[:n].reshape(image.shape)


# ----------------------------- JAX glue -------------------------------------

def make_grid(image, nrow=4, padding=2, pad_value=1.0):
    """JAX re-implementation of torchvision.utils.make_grid (NCHW in, CHW out)."""
    B, C, H, W = image.shape
    xmaps = min(nrow, B)
    ymaps = int(math.ceil(B / xmaps))
    if ymaps * xmaps != B:
        fill = jnp.full((ymaps * xmaps - B, C, H, W), pad_value, image.dtype)
        image = jnp.concatenate([image, fill], axis=0)
    # pad top/left of each cell
    cells = jnp.pad(image, ((0, 0), (0, 0), (padding, 0), (padding, 0)),
                    constant_values=pad_value)
    Hp, Wp = H + padding, W + padding
    grid = cells.reshape(ymaps, xmaps, C, Hp, Wp)
    grid = grid.transpose(2, 0, 3, 1, 4).reshape(C, ymaps * Hp, xmaps * Wp)
    # trailing border on bottom/right
    grid = jnp.pad(grid, ((0, 0), (0, padding), (0, padding)),
                   constant_values=pad_value)
    return grid


def visualization_forward(image, tag=None, epoch=None, writer=None):
    """Equivalent of Visualization.forward. Returns the grid it would log."""
    img = normalize_image(image)
    grid = make_grid(img, nrow=4, pad_value=1.0)
    # TODO(synk): writer.add_image(tag, grid, epoch) is TensorBoard host I/O
    # with no Pallas/TPU equivalent; the computed grid is returned instead.
    return grid


# ----------------------------- main ------------------------------------------

if __name__ == "__main__":
    key = jax.random.PRNGKey(0)
    # Small NCHW batch consistent with make_grid(nrow=4): (8, 3, 16, 16)
    image = jax.random.normal(key, (8, 3, 16, 16), dtype=jnp.float32) * 3.0 + 1.0

    grid = visualization_forward(image, tag="train/images", epoch=0, writer=None)
    grid = jax.block_until_ready(grid)

    # Reference check in plain JAX
    ref_norm = (image - image.min()) / (image.max() - image.min() + 1e-6)
    ref_grid = make_grid(ref_norm, nrow=4, pad_value=1.0)
    assert grid.shape == (3, 2 * 18 + 2, 4 * 18 + 2), grid.shape
    assert jnp.allclose(grid, ref_grid, atol=1e-6, rtol=1e-6)

    # Also exercise the tiled two-pass (split reduce + normalize) path explicitly.
    norm2 = jax.block_until_ready(normalize_image(image, fused_elems_limit=0))
    assert jnp.allclose(norm2, ref_norm, atol=1e-6, rtol=1e-6)

    print("KERNEL_OK")
</pallas_src>

<mosaic_0001>
module attributes {stable_mosaic.version = 11 : i64} {
  func.func @_fused_kernel(%arg0: i32, %arg1: memref<48x128xf32, #tpu.memory_space<vmem>>, %arg2: memref<48x128xf32, #tpu.memory_space<vmem>>) attributes {dimension_semantics = [#tpu.dimension_semantics<arbitrary>], iteration_bounds = array<i64: 1>, scalar_prefetch = 0 : i64, scratch_operands = 0 : i64, tpu.core_type = #tpu.core_type<tc>, window_params = [{pipeline_mode = #tpu.pipeline_mode<synchronous>, transform_indices = @transform_0, window_bounds = array<i64: 48, 128>}, {pipeline_mode = #tpu.pipeline_mode<synchronous>, transform_indices = @transform_1, window_bounds = array<i64: 48, 128>}]} {
    %c0 = arith.constant 0 : index
    %c0_0 = arith.constant 0 : index
    %0 = vector.load %arg1[%c0, %c0_0] : memref<48x128xf32, #tpu.memory_space<vmem>>, vector<48x128xf32>
    %1 = vector.shape_cast %0 : vector<48x128xf32> to vector<1x48x128xf32>
    %cst = arith.constant dense<0x7F800000> : vector<1xf32>
    %2 = vector.multi_reduction <minimumf>, %1, %cst [1, 2] : vector<1x48x128xf32> to vector<1xf32>
    %3 = vector.shape_cast %2 : vector<1xf32> to vector<1x1x1xf32>
    %4 = vector.extract %3[0, 0, 0] : f32 from vector<1x1x1xf32>
    %5 = vector.shape_cast %0 : vector<48x128xf32> to vector<1x48x128xf32>
    %cst_1 = arith.constant dense<0xFF800000> : vector<1xf32>
    %6 = vector.multi_reduction <maximumf>, %5, %cst_1 [1, 2] : vector<1x48x128xf32> to vector<1xf32>
    %7 = vector.shape_cast %6 : vector<1xf32> to vector<1x1x1xf32>
    %8 = vector.extract %7[0, 0, 0] : f32 from vector<1x1x1xf32>
    %9 = arith.subf %8, %4 : f32
    %cst_2 = arith.constant 9.99999997E-7 : f32
    %10 = arith.addf %9, %cst_2 : f32
    %cst_3 = arith.constant 1.000000e+00 : f32
    %11 = arith.divf %cst_3, %10 : f32
    %12 = vector.broadcast %4 : f32 to vector<48x128xf32>
    %13 = arith.subf %0, %12 : vector<48x128xf32>
    %14 = vector.broadcast %11 : f32 to vector<48x128xf32>
    %15 = arith.mulf %13, %14 : vector<48x128xf32>
    %c0_4 = arith.constant 0 : index
    %c0_5 = arith.constant 0 : index
    %16 = vector.load %arg2[%c0_4, %c0_5] : memref<48x128xf32, #tpu.memory_space<vmem>>, vector<48x128xf32>
    tpu.vector_store %arg2[%c0_4, %c0_5], %15 {strides = array<i32>} : memref<48x128xf32, #tpu.memory_space<vmem>>, vector<48x128xf32>,
    return
  }
  func.func @transform_0(%arg0: i32) -> (i32, i32) {
    %c0_i32 = arith.constant 0 : i32
    %c0_i32_0 = arith.constant 0 : i32
    %c0_i32_1 = arith.constant 0 : i32
    return %c0_i32, %c0_i32_0 : i32, i32
  }
  func.func @transform_1(%arg0: i32) -> (i32, i32) {
    %c0_i32 = arith.constant 0 : i32
    %c0_i32_0 = arith.constant 0 : i32
    %c0_i32_1 = arith.constant 0 : i32
    return %c0_i32, %c0_i32_0 : i32, i32
  }
}

</mosaic_0001>

<llo_original>
// kernel: normalize_image.1
$region0: #{normalize_image.1}
  #allocation0 [shape = 'u32[]', space=smem, size = 0x4, offset = 0x4, fixed_abs, tag = 'smem constant byte address 0x4 - core index']
  #allocation1 [shape = 'u32[72,128]{1,0:T(1,128)}', space=vmem, size = 0x9000, scoped, tag = 'internal scratch']
  %s0 = inlined_call_operand.vmem [shape: f32[48,128], index: 0, kind: input, shape index: {}]
  %s1 = inlined_call_operand.vmem [shape: f32[48,128], index: 1, kind: output, shape index: {}]
  %s2 = sld [smem:[#allocation0]]
  $region14: #{normalize_image.1} parent=0
    _
  %s4 = ssub.s32 1, %s2
  %s5 = scalar_select 0, %s4, %s2
  // Predicated region
  $region2: #{normalize_image.1} parent=0 // pred_check
    _
  $region3: #{normalize_image.1} parent=0 // pred_check_branch
    %7 = sbr.rel (0) target = $region5
  $region4: #{normalize_image.1} parent=0 // pred_region
    _
  $region5: #{normalize_image.1} parent=0 // pred_fallthru
    _
  %v8 = vld [vmem:[%s0] sm:$0xff]
  %v9 = vld [vmem:[%s0 + $0x8] sm:$0xff]
  %v10 = vld [vmem:[%s0 + $0x10] sm:$0xff]
  %v11 = vld [vmem:[%s0 + $0x18] sm:$0xff]
  %v12 = vld [vmem:[%s0 + $0x20] sm:$0xff]
  %v13 = vld [vmem:[%s0 + $0x28] sm:$0xff]
  %v14 = vmin.f32 %v8, %v12
  %v15 = vmin.f32 %v9, %v13
  %v16 = vmin.f32 %v14, %v15
  %v17 = vmin.f32 %v10, %v11
  %v18 = vmin.f32 %v16, %v17
  %19 = vmin.xlane.f32.xlu0 %v18
  %v20 = vpop.xlane.xlu0 %19
  %v21 = vrot.slane %v20, 4
  %v22 = vmin.f32 %v20, %v21
  %v23 = vrot.slane %v22, 2
  %v24 = vmin.f32 %v22, %v23
  %v25 = vrot.slane %v24, 1
  %v26 = vmin.f32 %v24, %v25
  %s27 = vtos %v26
  %v28 = vmax.f32 %v8, %v12
  %v29 = vmax.f32 %v9, %v13
  %v30 = vmax.f32 %v28, %v29
  %v31 = vmax.f32 %v10, %v11
  %v32 = vmax.f32 %v30, %v31
  %33 = vmax.xlane.f32.xlu0 %v32
  %v34 = vpop.xlane.xlu0 %33
  %v35 = vrot.slane %v34, 4
  %v36 = vmax.f32 %v34, %v35
  %v37 = vrot.slane %v36, 2
  %v38 = vmax.f32 %v36, %v37
  %v39 = vrot.slane %v38, 1
  %v40 = vmax.f32 %v38, %v39
  %s41 = vtos %v40
  %s42 = ssub.f32 %s41, %s27
  %s43 = sadd.f32 %s42, 1e-06
  %v44 = vstv %s43
  %v45 = vrcp.pop %v44
  %v46 = vmul.f32 %v44, %v45
  %v47 = vsub.f32 1.0, %v46
  %v48 = vmul.f32 %v45, %v47
  %v49 = vadd.f32 %v45, %v48
  %vm50 = vweird.f32 %v44
  %vm51 = vweird.f32 %v45
  %vm52 = vmor %vm50, %vm51
  %v53 = vsel %vm52, %v45, %v49
  %v54 = vand.u32 2147483647, %v44
  %vm55 = vcmp.eq.f32.partialorder %v54, 8.507059e+37
  %v56 = vand.u32 %v44, 2147483648
  %v57 = vor.u32 1.1754944e-38, %v56
  %v58 = vsel %vm55, %v57, %v53
  %s59 = vtos %v58
  %v60 = vstv %s27
  %v61 = vsub.f32 %v8, %v60
  %v62 = vsub.f32 %v9, %v60
  %v63 = vsub.f32 %v10, %v60
  %v64 = vsub.f32 %v11, %v60
  %v65 = vsub.f32 %v12, %v60
  %v66 = vsub.f32 %v13, %v60
  %v67 = vstv %s59
  %v68 = vmul.f32 %v61, %v67
  %v69 = vmul.f32 %v62, %v67
  %v70 = vmul.f32 %v63, %v67
  %v71 = vmul.f32 %v64, %v67
  %v72 = vmul.f32 %v65, %v67
  %v73 = vmul.f32 %v66, %v67
  %74 = vst [vmem:[%s1] sm:$0xff] %v68
  %75 = vst [vmem:[%s1 + $0x8] sm:$0xff] %v69
  %76 = vst [vmem:[%s1 + $0x10] sm:$0xff] %v70
  %77 = vst [vmem:[%s1 + $0x18] sm:$0xff] %v71
  %78 = vst [vmem:[%s1 + $0x20] sm:$0xff] %v72
  %79 = vst [vmem:[%s1 + $0x28] sm:$0xff] %v73
  // Predicated region
  $region6: #{normalize_image.1} parent=0 // pred_check
    _
  $region7: #{normalize_image.1} parent=0 // pred_check_branch
    %81 = sbr.rel (0) target = $region9
  $region8: #{normalize_image.1} parent=0 // pred_region
    _
  $region9: #{normalize_image.1} parent=0 // pred_fallthru
    _
  // Predicated region
  $region10: #{normalize_image.1} parent=0 // pred_check
    _
  $region11: #{normalize_image.1} parent=0 // pred_check_branch
    %83 = sbr.rel (0) target = $region13
  $region12: #{normalize_image.1} parent=0 // pred_region
    _
  $region13: #{normalize_image.1} parent=0 // pred_fallthru
    _

</llo_original>
